<compile_context>
chip_gen: v5e
topology: v5e:2x2
jax: 0.10.0
libtpu: 0.0.40
codegen_flags: <defaults>
</compile_context>

<pallas_src>
import jax
import jax.numpy as jnp
from jax.experimental import pallas as pl
from jax.experimental.pallas import tpu as pltpu


def _gcn_kernel(x_ref, adj_ref, wg_ref, bg_ref, wf_ref, bf_ref, o_ref):
    # x_ref:  (Bb, N, D_in)   adj_ref: (Bb, N, N)
    # wg_ref: (D_in, H)       bg_ref:  (1, H)
    # wf_ref: (N*H, O)        bf_ref:  (1, O)
    # o_ref:  (Bb, O)
    Bb, N, D = x_ref.shape
    H = wg_ref.shape[1]

    # --- GraphConvolution "support": one MXU pass for the whole batch block.
    # (Bb, N, D) -> (Bb*N, D) only merges leading dims (N == 8 == sublane tile
    # in this config), so it is layout-preserving (no relayout).
    support = jnp.dot(x_ref[...].reshape(Bb * N, D), wg_ref[...],
                      preferred_element_type=jnp.float32)            # (Bb*N, H)
    support = support.reshape(Bb, N, H)                               # split leading dim (free)

    # --- Neighbourhood aggregation on the VPU, statically unrolled over the
    # tiny neighbour axis.  Keeps the MXU free for the two big matmuls and
    # avoids Bb serial NxNxH MXU push+drain round trips per grid step:
    #   h[b, i, :] = sum_j adj[b, i, j] * support[b, j, :]
    adjv = adj_ref[...]                                               # (Bb, N, N)
    h = jnp.zeros((Bb, N, H), jnp.float32)
    for j in range(N):                                                # N is small (node_dim)
        h = h + adjv[:, :, j:j + 1] * support[:, j:j + 1, :]
    h = h + bg_ref[...].reshape(1, 1, H)
    h = jnp.maximum(h, 0.0)                        # flatten + ReLU == relu(h)

    # --- fc1 as ONE matmul over the flattened node*hidden axis.
    # NOTE: this reshape merges (N, H) sublane x lane -> lane (32 -> 256
    # lanes), a small relayout; kept because it turns fc1 into a single dense
    # (Bb, N*H) @ (N*H, O) MXU pass instead of N tiny per-node matmuls.
    flat = h.reshape(Bb, N * H)
    o_ref[...] = (jnp.dot(flat, wf_ref[...], preferred_element_type=jnp.float32)
                  + bf_ref[...])


def prepare_gcn_params(w_gcn, b_gcn, w_fc1, b_fc1):
    """One-time parameter preprocessing (hoisted out of the per-call path).

    w_gcn: (D_in, H), b_gcn: (H,), w_fc1: (O, N*H) (torch layout), b_fc1: (O,).
    """
    wg = jnp.asarray(w_gcn, jnp.float32)                              # (D_in, H)
    bg = jnp.asarray(b_gcn, jnp.float32).reshape(1, -1)               # (1, H)
    # torch's per-sample flatten of (N, H) is row-major, so fc1 is
    # flat @ w_fc1.T; pre-transpose once to (N*H, O).
    wf = jnp.asarray(w_fc1, jnp.float32).T                            # (N*H, O)
    bf = jnp.asarray(b_fc1, jnp.float32).reshape(1, -1)               # (1, O)
    return wg, bg, wf, bf


def _pick_block_b(B, N, D_in, H, O):
    """Derive the batch block size from a conservative VMEM budget."""
    # Per-sample VMEM bytes: double-buffered x/adj/out blocks + ~6x (N, H) f32
    # temporaries (support, aggregation accumulator, relu'd h, flat relayout,
    # slack).  Weights are KB-scale and ignored.
    per_sample = 4 * (2 * (N * D_in + N * N + O) + 6 * N * H)
    budget = 20 * 1024 * 1024          # safe on v5e/v6e (128 MiB) and v7x (64 MiB)
    max_bb = max(8, (budget // per_sample) // 8 * 8)

    kind = ""
    try:
        kind = jax.devices()[0].device_kind.lower()
    except Exception:
        pass
    # v7x has 2 TensorCores per chip: keep 2 balanced "parallel" steps.
    # Single-TC chips (v5e/v6e) prefer 1 step (fewest fixed per-step overheads).
    want_steps = 2 if ("v7" in kind and B > 8) else 1
    bb = min(int(max_bb), pl.cdiv(B, want_steps))
    return max(1, min(bb, B))


def gcn_forward(x, adj, params, *, block_b=None):
    """x: (B, N, D_in), adj: (B, N, N), params = prepare_gcn_params(...).
    Returns (B, O) float32."""
    wg, bg, wf, bf = params
    B, N, D_in = x.shape
    H = wg.shape[1]
    O = wf.shape[1]
    assert adj.shape == (B, N, N) and wf.shape[0] == N * H

    if block_b is None:
        block_b = _pick_block_b(B, N, D_in, H, O)
    block_b = max(1, min(int(block_b), B))
    if block_b < B:
        # Partial-batch blocks: keep the output block's sublane dim 8-aligned
        # ((8,128) rule on the (block_b, O) output block).
        block_b = min(((block_b + 7) // 8) * 8, B)
    n_steps = pl.cdiv(B, block_b)

    x = x.astype(jnp.float32)
    adj = adj.astype(jnp.float32)

    flops = int(2 * B * N * H * (D_in + N + O))
    bytes_accessed = int(4 * (B * (N * D_in + N * N + O)
                              + D_in * H + H + N * H * O + O))

    out = pl.pallas_call(
        _gcn_kernel,
        out_shape=jax.ShapeDtypeStruct((B, O), jnp.float32),
        grid_spec=pltpu.PrefetchScalarGridSpec(
            num_scalar_prefetch=0,
            grid=(n_steps,),
            in_specs=[
                pl.BlockSpec((block_b, N, D_in), lambda s: (s, 0, 0)),
                pl.BlockSpec((block_b, N, N), lambda s: (s, 0, 0)),
                # Weights/biases: constant block index -> resident across steps.
                pl.BlockSpec((D_in, H), lambda s: (0, 0)),
                pl.BlockSpec((1, H), lambda s: (0, 0)),
                pl.BlockSpec((N * H, O), lambda s: (0, 0)),
                pl.BlockSpec((1, O), lambda s: (0, 0)),
            ],
            out_specs=pl.BlockSpec((block_b, O), lambda s: (s, 0)),
        ),
        compiler_params=pltpu.CompilerParams(
            dimension_semantics=("parallel",),
            # v5e scoped default is 16 MiB, v6e/v7x 32 MiB; raise it so the
            # large double-buffered batch blocks fit (48 MiB < v7x's 64 MiB
            # physical VMEM per TensorCore).
            vmem_limit_bytes=48 * 1024 * 1024,
        ),
        cost_estimate=pl.CostEstimate(
            flops=flops, transcendentals=0, bytes_accessed=bytes_accessed),
    )(x, adj, wg, bg, wf, bf)
    return out


def _reference(x, adj, w_gcn, b_gcn, w_fc1, b_fc1):
    h = jnp.einsum("bnm,bmh->bnh", adj, jnp.einsum("bnd,dh->bnh", x, w_gcn)) + b_gcn
    flat = jnp.maximum(h.reshape(h.shape[0], -1), 0.0)
    return flat @ w_fc1.T + b_fc1


if __name__ == "__main__":
    # Small shapes consistent with the module.
    B, node_dim, input_dim, hidden_dim, output_dim = 16, 8, 16, 32, 8

    key = jax.random.PRNGKey(0)
    k1, k2, k3, k4, k5, k6 = jax.random.split(key, 6)

    x = jax.random.normal(k1, (B, node_dim, input_dim), dtype=jnp.float32)
    adj = jax.random.uniform(k2, (B, node_dim, node_dim), dtype=jnp.float32)

    # Deterministic synthetic parameters (torch layout: w_fc1 is (O, N*H)).
    w_gcn = jax.random.normal(k3, (input_dim, hidden_dim), dtype=jnp.float32) * 0.1
    b_gcn = jax.random.normal(k4, (hidden_dim,), dtype=jnp.float32) * 0.1
    w_fc1 = jax.random.normal(k5, (output_dim, node_dim * hidden_dim),
                              dtype=jnp.float32) * 0.05
    b_fc1 = jax.random.normal(k6, (output_dim,), dtype=jnp.float32) * 0.05

    params = prepare_gcn_params(w_gcn, b_gcn, w_fc1, b_fc1)   # one-time prep

    out = gcn_forward(x, adj, params)
    out = jax.block_until_ready(out)

    ref = _reference(x, adj, w_gcn, b_gcn, w_fc1, b_fc1)
    assert out.shape == (B, output_dim)
    assert jnp.allclose(out, ref, atol=5e-4, rtol=5e-4), "mismatch vs JAX reference"

    print("KERNEL_OK")
</pallas_src>

<mosaic_0001>
module attributes {stable_mosaic.version = 11 : i64} {
  func.func @_gcn_kernel(%arg0: i32, %arg1: memref<16x8x16xf32, #tpu.memory_space<vmem>>, %arg2: memref<16x8x8xf32, #tpu.memory_space<vmem>>, %arg3: memref<16x32xf32, #tpu.memory_space<vmem>>, %arg4: memref<1x32xf32, #tpu.memory_space<vmem>>, %arg5: memref<256x8xf32, #tpu.memory_space<vmem>>, %arg6: memref<1x8xf32, #tpu.memory_space<vmem>>, %arg7: memref<16x8xf32, #tpu.memory_space<vmem>>) attributes {dimension_semantics = [#tpu.dimension_semantics<parallel>], iteration_bounds = array<i64: 1>, scalar_prefetch = 0 : i64, scratch_operands = 0 : i64, tpu.core_type = #tpu.core_type<tc>, window_params = [{transform_indices = @transform_0, window_bounds = array<i64: 16, 8, 16>}, {transform_indices = @transform_1, window_bounds = array<i64: 16, 8, 8>}, {pipeline_mode = #tpu.pipeline_mode<synchronous>, transform_indices = @transform_2, window_bounds = array<i64: 16, 32>}, {pipeline_mode = #tpu.pipeline_mode<synchronous>, transform_indices = @transform_3, window_bounds = array<i64: 1, 32>}, {pipeline_mode = #tpu.pipeline_mode<synchronous>, transform_indices = @transform_4, window_bounds = array<i64: 256, 8>}, {pipeline_mode = #tpu.pipeline_mode<synchronous>, transform_indices = @transform_5, window_bounds = array<i64: 1, 8>}, {transform_indices = @transform_6, window_bounds = array<i64: 16, 8>}]} {
    %c0 = arith.constant 0 : index
    %c0_0 = arith.constant 0 : index
    %c0_1 = arith.constant 0 : index
    %0 = vector.load %arg1[%c0, %c0_0, %c0_1] : memref<16x8x16xf32, #tpu.memory_space<vmem>>, vector<16x8x16xf32>
    %1 = vector.shape_cast %0 : vector<16x8x16xf32> to vector<128x16xf32>
    %c0_2 = arith.constant 0 : index
    %c0_3 = arith.constant 0 : index
    %2 = vector.load %arg3[%c0_2, %c0_3] : memref<16x32xf32, #tpu.memory_space<vmem>>, vector<16x32xf32>
    %cst = arith.constant dense<0.000000e+00> : vector<128x32xf32>
    %3 = tpu.matmul %1, %2, %cst {dimension_numbers = #tpu.dot_dimension_numbers<[1], [0], [0], [1], [0, 0, 1, 1], [], []>} : vector<128x16xf32>, vector<16x32xf32>, vector<128x32xf32> -> vector<128x32xf32>
    %4 = vector.shape_cast %3 : vector<128x32xf32> to vector<16x8x32xf32>
    %c0_4 = arith.constant 0 : index
    %c0_5 = arith.constant 0 : index
    %c0_6 = arith.constant 0 : index
    %5 = vector.load %arg2[%c0_4, %c0_5, %c0_6] : memref<16x8x8xf32, #tpu.memory_space<vmem>>, vector<16x8x8xf32>
    %cst_7 = arith.constant 0.000000e+00 : f32
    %6 = vector.broadcast %cst_7 : f32 to vector<16x8x32xf32>
    %7 = vector.extract_strided_slice %5 {offsets = [0, 0, 0], sizes = [16, 8, 1], strides = [1, 1, 1]} : vector<16x8x8xf32> to vector<16x8x1xf32>
    %8 = vector.extract_strided_slice %4 {offsets = [0, 0, 0], sizes = [16, 1, 32], strides = [1, 1, 1]} : vector<16x8x32xf32> to vector<16x1x32xf32>
    %9 = vector.broadcast %7 : vector<16x8x1xf32> to vector<16x8x32xf32>
    %10 = vector.broadcast %8 : vector<16x1x32xf32> to vector<16x8x32xf32>
    %11 = arith.mulf %9, %10 : vector<16x8x32xf32>
    %12 = arith.addf %6, %11 : vector<16x8x32xf32>
    %13 = vector.extract_strided_slice %5 {offsets = [0, 0, 1], sizes = [16, 8, 1], strides = [1, 1, 1]} : vector<16x8x8xf32> to vector<16x8x1xf32>
    %14 = vector.extract_strided_slice %4 {offsets = [0, 1, 0], sizes = [16, 1, 32], strides = [1, 1, 1]} : vector<16x8x32xf32> to vector<16x1x32xf32>
    %15 = vector.broadcast %13 : vector<16x8x1xf32> to vector<16x8x32xf32>
    %16 = vector.broadcast %14 : vector<16x1x32xf32> to vector<16x8x32xf32>
    %17 = arith.mulf %15, %16 : vector<16x8x32xf32>
    %18 = arith.addf %12, %17 : vector<16x8x32xf32>
    %19 = vector.extract_strided_slice %5 {offsets = [0, 0, 2], sizes = [16, 8, 1], strides = [1, 1, 1]} : vector<16x8x8xf32> to vector<16x8x1xf32>
    %20 = vector.extract_strided_slice %4 {offsets = [0, 2, 0], sizes = [16, 1, 32], strides = [1, 1, 1]} : vector<16x8x32xf32> to vector<16x1x32xf32>
    %21 = vector.broadcast %19 : vector<16x8x1xf32> to vector<16x8x32xf32>
    %22 = vector.broadcast %20 : vector<16x1x32xf32> to vector<16x8x32xf32>
    %23 = arith.mulf %21, %22 : vector<16x8x32xf32>
    %24 = arith.addf %18, %23 : vector<16x8x32xf32>
    %25 = vector.extract_strided_slice %5 {offsets = [0, 0, 3], sizes = [16, 8, 1], strides = [1, 1, 1]} : vector<16x8x8xf32> to vector<16x8x1xf32>
    %26 = vector.extract_strided_slice %4 {offsets = [0, 3, 0], sizes = [16, 1, 32], strides = [1, 1, 1]} : vector<16x8x32xf32> to vector<16x1x32xf32>
    %27 = vector.broadcast %25 : vector<16x8x1xf32> to vector<16x8x32xf32>
    %28 = vector.broadcast %26 : vector<16x1x32xf32> to vector<16x8x32xf32>
    %29 = arith.mulf %27, %28 : vector<16x8x32xf32>
    %30 = arith.addf %24, %29 : vector<16x8x32xf32>
    %31 = vector.extract_strided_slice %5 {offsets = [0, 0, 4], sizes = [16, 8, 1], strides = [1, 1, 1]} : vector<16x8x8xf32> to vector<16x8x1xf32>
    %32 = vector.extract_strided_slice %4 {offsets = [0, 4, 0], sizes = [16, 1, 32], strides = [1, 1, 1]} : vector<16x8x32xf32> to vector<16x1x32xf32>
    %33 = vector.broadcast %31 : vector<16x8x1xf32> to vector<16x8x32xf32>
    %34 = vector.broadcast %32 : vector<16x1x32xf32> to vector<16x8x32xf32>
    %35 = arith.mulf %33, %34 : vector<16x8x32xf32>
    %36 = arith.addf %30, %35 : vector<16x8x32xf32>
    %37 = vector.extract_strided_slice %5 {offsets = [0, 0, 5], sizes = [16, 8, 1], strides = [1, 1, 1]} : vector<16x8x8xf32> to vector<16x8x1xf32>
    %38 = vector.extract_strided_slice %4 {offsets = [0, 5, 0], sizes = [16, 1, 32], strides = [1, 1, 1]} : vector<16x8x32xf32> to vector<16x1x32xf32>
    %39 = vector.broadcast %37 : vector<16x8x1xf32> to vector<16x8x32xf32>
    %40 = vector.broadcast %38 : vector<16x1x32xf32> to vector<16x8x32xf32>
    %41 = arith.mulf %39, %40 : vector<16x8x32xf32>
    %42 = arith.addf %36, %41 : vector<16x8x32xf32>
    %43 = vector.extract_strided_slice %5 {offsets = [0, 0, 6], sizes = [16, 8, 1], strides = [1, 1, 1]} : vector<16x8x8xf32> to vector<16x8x1xf32>
    %44 = vector.extract_strided_slice %4 {offsets = [0, 6, 0], sizes = [16, 1, 32], strides = [1, 1, 1]} : vector<16x8x32xf32> to vector<16x1x32xf32>
    %45 = vector.broadcast %43 : vector<16x8x1xf32> to vector<16x8x32xf32>
    %46 = vector.broadcast %44 : vector<16x1x32xf32> to vector<16x8x32xf32>
    %47 = arith.mulf %45, %46 : vector<16x8x32xf32>
    %48 = arith.addf %42, %47 : vector<16x8x32xf32>
    %49 = vector.extract_strided_slice %5 {offsets = [0, 0, 7], sizes = [16, 8, 1], strides = [1, 1, 1]} : vector<16x8x8xf32> to vector<16x8x1xf32>
    %50 = vector.extract_strided_slice %4 {offsets = [0, 7, 0], sizes = [16, 1, 32], strides = [1, 1, 1]} : vector<16x8x32xf32> to vector<16x1x32xf32>
    %51 = vector.broadcast %49 : vector<16x8x1xf32> to vector<16x8x32xf32>
    %52 = vector.broadcast %50 : vector<16x1x32xf32> to vector<16x8x32xf32>
    %53 = arith.mulf %51, %52 : vector<16x8x32xf32>
    %54 = arith.addf %48, %53 : vector<16x8x32xf32>
    %c0_8 = arith.constant 0 : index
    %c0_9 = arith.constant 0 : index
    %55 = vector.load %arg4[%c0_8, %c0_9] : memref<1x32xf32, #tpu.memory_space<vmem>>, vector<1x32xf32>
    %56 = vector.shape_cast %55 : vector<1x32xf32> to vector<1x1x32xf32>
    %57 = vector.broadcast %56 : vector<1x1x32xf32> to vector<16x8x32xf32>
    %58 = arith.addf %54, %57 : vector<16x8x32xf32>
    %cst_10 = arith.constant 0.000000e+00 : f32
    %59 = vector.broadcast %cst_10 : f32 to vector<16x8x32xf32>
    %60 = arith.maximumf %58, %59 : vector<16x8x32xf32>
    %61 = vector.shape_cast %60 : vector<16x8x32xf32> to vector<16x256xf32>
    %c0_11 = arith.constant 0 : index
    %c0_12 = arith.constant 0 : index
    %62 = vector.load %arg5[%c0_11, %c0_12] : memref<256x8xf32, #tpu.memory_space<vmem>>, vector<256x8xf32>
    %cst_13 = arith.constant dense<0.000000e+00> : vector<16x8xf32>
    %63 = tpu.matmul %61, %62, %cst_13 {dimension_numbers = #tpu.dot_dimension_numbers<[1], [0], [0], [1], [0, 0, 1, 1], [], []>} : vector<16x256xf32>, vector<256x8xf32>, vector<16x8xf32> -> vector<16x8xf32>
    %c0_14 = arith.constant 0 : index
    %c0_15 = arith.constant 0 : index
    %64 = vector.load %arg6[%c0_14, %c0_15] : memref<1x8xf32, #tpu.memory_space<vmem>>, vector<1x8xf32>
    %65 = vector.broadcast %64 : vector<1x8xf32> to vector<16x8xf32>
    %66 = arith.addf %63, %65 : vector<16x8xf32>
    %c0_16 = arith.constant 0 : index
    %c0_17 = arith.constant 0 : index
    %67 = vector.load %arg7[%c0_16, %c0_17] : memref<16x8xf32, #tpu.memory_space<vmem>>, vector<16x8xf32>
    tpu.vector_store %arg7[%c0_16, %c0_17], %66 {strides = array<i32>} : memref<16x8xf32, #tpu.memory_space<vmem>>, vector<16x8xf32>,
    return
  }
  func.func @transform_0(%arg0: i32) -> (i32, i32, i32) {
    %c0_i32 = arith.constant 0 : i32
    %c0_i32_0 = arith.constant 0 : i32
    %c0_i32_1 = arith.constant 0 : i32
    return %arg0, %c0_i32, %c0_i32_0 : i32, i32, i32
  }
  func.func @transform_1(%arg0: i32) -> (i32, i32, i32) {
    %c0_i32 = arith.constant 0 : i32
    %c0_i32_0 = arith.constant 0 : i32
    %c0_i32_1 = arith.constant 0 : i32
    return %arg0, %c0_i32, %c0_i32_0 : i32, i32, i32
  }
  func.func @transform_2(%arg0: i32) -> (i32, i32) {
    %c0_i32 = arith.constant 0 : i32
    %c0_i32_0 = arith.constant 0 : i32
    %c0_i32_1 = arith.constant 0 : i32
    return %c0_i32, %c0_i32_0 : i32, i32
  }
  func.func @transform_3(%arg0: i32) -> (i32, i32) {
    %c0_i32 = arith.constant 0 : i32
    %c0_i32_0 = arith.constant 0 : i32
    %c0_i32_1 = arith.constant 0 : i32
    return %c0_i32, %c0_i32_0 : i32, i32
  }
  func.func @transform_4(%arg0: i32) -> (i32, i32) {
    %c0_i32 = arith.constant 0 : i32
    %c0_i32_0 = arith.constant 0 : i32
    %c0_i32_1 = arith.constant 0 : i32
    return %c0_i32, %c0_i32_0 : i32, i32
  }
  func.func @transform_5(%arg0: i32) -> (i32, i32) {
    %c0_i32 = arith.constant 0 : i32
    %c0_i32_0 = arith.constant 0 : i32
    %c0_i32_1 = arith.constant 0 : i32
    return %c0_i32, %c0_i32_0 : i32, i32
  }
  func.func @transform_6(%arg0: i32) -> (i32, i32) {
    %c0_i32 = arith.constant 0 : i32
    %c0_i32_0 = arith.constant 0 : i32
    return %arg0, %c0_i32 : i32, i32
  }
}

</mosaic_0001>

<llo_original>
// kernel: tpu_custom_call.1
$region0: #{tpu_custom_call.1}
  #allocation0 [shape = 'u32[]', space=smem, size = 0x4, offset = 0x4, fixed_abs, tag = 'smem constant byte address 0x4 - core index']
  #allocation1 [shape = 'u32[72,128]{1,0:T(1,128)}', space=vmem, size = 0x9000, scoped, tag = 'internal scratch']
  %s0 = inlined_call_operand.vmem [shape: f32[16,8,16], index: 0, kind: input, shape index: {}]
  %s1 = inlined_call_operand.vmem [shape: f32[16,8,8], index: 1, kind: input, shape index: {}]
  %s2 = inlined_call_operand.vmem [shape: f32[16,32], index: 2, kind: input, shape index: {}]
  %s3 = inlined_call_operand.vmem [shape: f32[1,32], index: 3, kind: input, shape index: {}]
  %s4 = inlined_call_operand.vmem [shape: f32[256,8], index: 4, kind: input, shape index: {}]
  %s5 = inlined_call_operand.vmem [shape: f32[1,8], index: 5, kind: input, shape index: {}]
  %s6 = inlined_call_operand.vmem [shape: f32[16,8], index: 6, kind: output, shape index: {}]
  %s7 = sld [smem:[#allocation0]]
  $region34: #{tpu_custom_call.1} parent=0
    _
  %s9 = ssub.s32 1, %s7
  %s10 = scalar_select 0, %s9, %s7
  // Predicated region
  $region2: #{tpu_custom_call.1} parent=0 // pred_check
    _
  $region3: #{tpu_custom_call.1} parent=0 // pred_check_branch
    %12 = sbr.rel (0) target = $region5
  $region4: #{tpu_custom_call.1} parent=0 // pred_region
    _
  $region5: #{tpu_custom_call.1} parent=0 // pred_fallthru
    _
  // Predicated region
  $region6: #{tpu_custom_call.1} parent=0 // pred_check
    _
  $region7: #{tpu_custom_call.1} parent=0 // pred_check_branch
    %14 = sbr.rel (0) target = $region9
  $region8: #{tpu_custom_call.1} parent=0 // pred_region
    _
  $region9: #{tpu_custom_call.1} parent=0 // pred_fallthru
    _
  // Predicated region
  $region10: #{tpu_custom_call.1} parent=0 // pred_check
    _
  $region11: #{tpu_custom_call.1} parent=0 // pred_check_branch
    %16 = sbr.rel (0) target = $region13
  $region12: #{tpu_custom_call.1} parent=0 // pred_region
    _
  $region13: #{tpu_custom_call.1} parent=0 // pred_fallthru
    _
  // Predicated region
  $region14: #{tpu_custom_call.1} parent=0 // pred_check
    _
  $region15: #{tpu_custom_call.1} parent=0 // pred_check_branch
    %18 = sbr.rel (0) target = $region17
  $region16: #{tpu_custom_call.1} parent=0 // pred_region
    _
  $region17: #{tpu_custom_call.1} parent=0 // pred_fallthru
    _
  // Predicated region
  $region18: #{tpu_custom_call.1} parent=0 // pred_check
    _
  $region19: #{tpu_custom_call.1} parent=0 // pred_check_branch
    %20 = sbr.rel (0) target = $region21
  $region20: #{tpu_custom_call.1} parent=0 // pred_region
    _
  $region21: #{tpu_custom_call.1} parent=0 // pred_fallthru
    _
  // Predicated region
  $region22: #{tpu_custom_call.1} parent=0 // pred_check
    _
  $region23: #{tpu_custom_call.1} parent=0 // pred_check_branch
    %22 = sbr.rel (0) target = $region25
  $region24: #{tpu_custom_call.1} parent=0 // pred_region
    _
  $region25: #{tpu_custom_call.1} parent=0 // pred_fallthru
    _
  %v23 = vld [vmem:[%s0] sm:$0xff]
  %v24 = vld [vmem:[%s0 + $0x8] sm:$0xff]
  %v25 = vld [vmem:[%s0 + $0x10] sm:$0xff]
  %v26 = vld [vmem:[%s0 + $0x18] sm:$0xff]
  %v27 = vld [vmem:[%s0 + $0x20] sm:$0xff]
  %v28 = vld [vmem:[%s0 + $0x28] sm:$0xff]
  %v29 = vld [vmem:[%s0 + $0x30] sm:$0xff]
  %v30 = vld [vmem:[%s0 + $0x38] sm:$0xff]
  %v31 = vld [vmem:[%s0 + $0x40] sm:$0xff]
  %v32 = vld [vmem:[%s0 + $0x48] sm:$0xff]
  %v33 = vld [vmem:[%s0 + $0x50] sm:$0xff]
  %v34 = vld [vmem:[%s0 + $0x58] sm:$0xff]
  %v35 = vld [vmem:[%s0 + $0x60] sm:$0xff]
  %v36 = vld [vmem:[%s0 + $0x68] sm:$0xff]
  %v37 = vld [vmem:[%s0 + $0x70] sm:$0xff]
  %v38 = vld [vmem:[%s0 + $0x78] sm:$0xff]
  %v39 = vld [vmem:[%s2] sm:$0xff]
  %v40 = vld [vmem:[%s2 + $0x8] sm:$0xff]
  %vm41 = vcmask 130048
  %v43 = vsel %vm41, %v23, 0
  %v46 = vsel %vm41, %v24, 0
  %v49 = vsel %vm41, %v25, 0
  %v52 = vsel %vm41, %v26, 0
  %v55 = vsel %vm41, %v27, 0
  %v58 = vsel %vm41, %v28, 0
  %v61 = vsel %vm41, %v29, 0
  %v64 = vsel %vm41, %v30, 0
  %v67 = vsel %vm41, %v31, 0
  %v70 = vsel %vm41, %v32, 0
  %v73 = vsel %vm41, %v33, 0
  %v76 = vsel %vm41, %v34, 0
  %v79 = vsel %vm41, %v35, 0
  %v82 = vsel %vm41, %v36, 0
  %v85 = vsel %vm41, %v37, 0
  %v88 = vsel %vm41, %v38, 0
  %90 = vmatpush.msra.mxu0 0.0
  %91 = vmatpush.msra.mxu0 0.0
  %92 = vmatpush.msra.mxu0 0.0
  %93 = vmatpush.msra.mxu0 0.0
  %94 = vmatpush.msra.mxu0 0.0
  %95 = vmatpush.msra.mxu0 0.0
  %96 = vmatpush.msra.mxu0 0.0
  %97 = vmatpush.msra.mxu0 0.0
  %98 = vmatpush.msra.mxu0 0.0
  %99 = vmatpush.msra.mxu0 0.0
  %100 = vmatpush.msra.mxu0 0.0
  %101 = vmatpush.msra.mxu0 0.0
  %102 = vmatpush.msra.mxu0 0.0
  %103 = vmatpush.msra.mxu0 0.0
  %104 = vmatpush.msra.mxu0 %v40
  %105 = vmatpush.msra.mxu0 %v39
  %106 = vmatmul.f32.gmra.mxu0 %v43
  %v107 = vpop.f32.mrf.mxu0
  %v108 = vadd.f32 0.0, %v107
  %109 = vmatmul.f32.gmra.mxu0 %v46
  %v110 = vpop.f32.mrf.mxu0
  %v111 = vadd.f32 0.0, %v110
  %112 = vmatmul.f32.gmra.mxu0 %v49
  %v113 = vpop.f32.mrf.mxu0
  %v114 = vadd.f32 0.0, %v113
  %115 = vmatmul.f32.gmra.mxu0 %v52
  %v116 = vpop.f32.mrf.mxu0
  %v117 = vadd.f32 0.0, %v116
  %118 = vmatmul.f32.gmra.mxu0 %v55
  %v119 = vpop.f32.mrf.mxu0
  %v120 = vadd.f32 0.0, %v119
  %121 = vmatmul.f32.gmra.mxu0 %v58
  %v122 = vpop.f32.mrf.mxu0
  %v123 = vadd.f32 0.0, %v122
  %124 = vmatmul.f32.gmra.mxu0 %v61
  %v125 = vpop.f32.mrf.mxu0
  %v126 = vadd.f32 0.0, %v125
  %127 = vmatmul.f32.gmra.mxu0 %v64
  %v128 = vpop.f32.mrf.mxu0
  %v129 = vadd.f32 0.0, %v128
  %130 = vmatmul.f32.gmra.mxu0 %v67
  %v131 = vpop.f32.mrf.mxu0
  %v132 = vadd.f32 0.0, %v131
  %133 = vmatmul.f32.gmra.mxu0 %v70
  %v134 = vpop.f32.mrf.mxu0
  %v135 = vadd.f32 0.0, %v134
  %136 = vmatmul.f32.gmra.mxu0 %v73
  %v137 = vpop.f32.mrf.mxu0
  %v138 = vadd.f32 0.0, %v137
  %139 = vmatmul.f32.gmra.mxu0 %v76
  %v140 = vpop.f32.mrf.mxu0
  %v141 = vadd.f32 0.0, %v140
  %142 = vmatmul.f32.gmra.mxu0 %v79
  %v143 = vpop.f32.mrf.mxu0
  %v144 = vadd.f32 0.0, %v143
  %145 = vmatmul.f32.gmra.mxu0 %v82
  %v146 = vpop.f32.mrf.mxu0
  %v147 = vadd.f32 0.0, %v146
  %148 = vmatmul.f32.gmra.mxu0 %v85
  %v149 = vpop.f32.mrf.mxu0
  %v150 = vadd.f32 0.0, %v149
  %151 = vmatmul.f32.gmra.mxu0 %v88
  %v152 = vpop.f32.mrf.mxu0
  %v153 = vadd.f32 0.0, %v152
  %154 = vdwg.mxu0
  %v155 = vld [vmem:[%s1] sm:$0xff]
  %v156 = vld [vmem:[%s1 + $0x8] sm:$0xff]
  %v157 = vld [vmem:[%s1 + $0x10] sm:$0xff]
  %v158 = vld [vmem:[%s1 + $0x18] sm:$0xff]
  %v159 = vld [vmem:[%s1 + $0x20] sm:$0xff]
  %v160 = vld [vmem:[%s1 + $0x28] sm:$0xff]
  %v161 = vld [vmem:[%s1 + $0x30] sm:$0xff]
  %v162 = vld [vmem:[%s1 + $0x38] sm:$0xff]
  %v163 = vld [vmem:[%s1 + $0x40] sm:$0xff]
  %v164 = vld [vmem:[%s1 + $0x48] sm:$0xff]
  %v165 = vld [vmem:[%s1 + $0x50] sm:$0xff]
  %v166 = vld [vmem:[%s1 + $0x58] sm:$0xff]
  %v167 = vld [vmem:[%s1 + $0x60] sm:$0xff]
  %v168 = vld [vmem:[%s1 + $0x68] sm:$0xff]
  %v169 = vld [vmem:[%s1 + $0x70] sm:$0xff]
  %v170 = vld [vmem:[%s1 + $0x78] sm:$0xff]
  %172 = vset.pattern.permute.xlu0 0
  %173 = vperm.xlu0 %172, %v155
  %v174 = vpop.permute.xlu0 %173
  %177 = vset.pattern.permute.xlu0 0
  %178 = vperm.xlu0 %177, %v156
  %v179 = vpop.permute.xlu0 %178
  %182 = vset.pattern.permute.xlu0 0
  %183 = vperm.xlu0 %182, %v157
  %v184 = vpop.permute.xlu0 %183
  %187 = vset.pattern.permute.xlu0 0
  %188 = vperm.xlu0 %187, %v158
  %v189 = vpop.permute.xlu0 %188
  %192 = vset.pattern.permute.xlu0 0
  %193 = vperm.xlu0 %192, %v159
  %v194 = vpop.permute.xlu0 %193
  %197 = vset.pattern.permute.xlu0 0
  %198 = vperm.xlu0 %197, %v160
  %v199 = vpop.permute.xlu0 %198
  %202 = vset.pattern.permute.xlu0 0
  %203 = vperm.xlu0 %202, %v161
  %v204 = vpop.permute.xlu0 %203
  %207 = vset.pattern.permute.xlu0 0
  %208 = vperm.xlu0 %207, %v162
  %v209 = vpop.permute.xlu0 %208
  %212 = vset.pattern.permute.xlu0 0
  %213 = vperm.xlu0 %212, %v163
  %v214 = vpop.permute.xlu0 %213
  %217 = vset.pattern.permute.xlu0 0
  %218 = vperm.xlu0 %217, %v164
  %v219 = vpop.permute.xlu0 %218
  %222 = vset.pattern.permute.xlu0 0
  %223 = vperm.xlu0 %222, %v165
  %v224 = vpop.permute.xlu0 %223
  %227 = vset.pattern.permute.xlu0 0
  %228 = vperm.xlu0 %227, %v166
  %v229 = vpop.permute.xlu0 %228
  %232 = vset.pattern.permute.xlu0 0
  %233 = vperm.xlu0 %232, %v167
  %v234 = vpop.permute.xlu0 %233
  %237 = vset.pattern.permute.xlu0 0
  %238 = vperm.xlu0 %237, %v168
  %v239 = vpop.permute.xlu0 %238
  %242 = vset.pattern.permute.xlu0 0
  %243 = vperm.xlu0 %242, %v169
  %v244 = vpop.permute.xlu0 %243
  %247 = vset.pattern.permute.xlu0 0
  %248 = vperm.xlu0 %247, %v170
  %v249 = vpop.permute.xlu0 %248
  %v251 = vperm.slane %v108, 0
  %v252 = vperm.slane %v111, 0
  %v253 = vperm.slane %v114, 0
  %v254 = vperm.slane %v117, 0
  %v255 = vperm.slane %v120, 0
  %v256 = vperm.slane %v123, 0
  %v257 = vperm.slane %v126, 0
  %v258 = vperm.slane %v129, 0
  %v259 = vperm.slane %v132, 0
  %v260 = vperm.slane %v135, 0
  %v261 = vperm.slane %v138, 0
  %v262 = vperm.slane %v141, 0
  %v263 = vperm.slane %v144, 0
  %v264 = vperm.slane %v147, 0
  %v265 = vperm.slane %v150, 0
  %v266 = vperm.slane %v153, 0
  %v267 = vmul.f32 %v174, %v251
  %v268 = vmul.f32 %v179, %v252
  %v269 = vmul.f32 %v184, %v253
  %v270 = vmul.f32 %v189, %v254
  %v271 = vmul.f32 %v194, %v255
  %v272 = vmul.f32 %v199, %v256
  %v273 = vmul.f32 %v204, %v257
  %v274 = vmul.f32 %v209, %v258
  %v275 = vmul.f32 %v214, %v259
  %v276 = vmul.f32 %v219, %v260
  %v277 = vmul.f32 %v224, %v261
  %v278 = vmul.f32 %v229, %v262
  %v279 = vmul.f32 %v234, %v263
  %v280 = vmul.f32 %v239, %v264
  %v281 = vmul.f32 %v244, %v265
  %v282 = vmul.f32 %v249, %v266
  %v283 = vadd.f32 %v267, 0.0
  %v284 = vadd.f32 %v268, 0.0
  %v285 = vadd.f32 %v269, 0.0
  %v286 = vadd.f32 %v270, 0.0
  %v287 = vadd.f32 %v271, 0.0
  %v288 = vadd.f32 %v272, 0.0
  %v289 = vadd.f32 %v273, 0.0
  %v290 = vadd.f32 %v274, 0.0
  %v291 = vadd.f32 %v275, 0.0
  %v292 = vadd.f32 %v276, 0.0
  %v293 = vadd.f32 %v277, 0.0
  %v294 = vadd.f32 %v278, 0.0
  %v295 = vadd.f32 %v279, 0.0
  %v296 = vadd.f32 %v280, 0.0
  %v297 = vadd.f32 %v281, 0.0
  %v298 = vadd.f32 %v282, 0.0
  %299 = vset.pattern.permute.xlu0 1
  %300 = vperm.xlu0 %299, %v155
  %v301 = vpop.permute.xlu0 %300
  %303 = vset.pattern.permute.xlu0 1
  %304 = vperm.xlu0 %303, %v156
  %v305 = vpop.permute.xlu0 %304
  %307 = vset.pattern.permute.xlu0 1
  %308 = vperm.xlu0 %307, %v157
  %v309 = vpop.permute.xlu0 %308
  %311 = vset.pattern.permute.xlu0 1
  %312 = vperm.xlu0 %311, %v158
  %v313 = vpop.permute.xlu0 %312
  %315 = vset.pattern.permute.xlu0 1
  %316 = vperm.xlu0 %315, %v159
  %v317 = vpop.permute.xlu0 %316
  %319 = vset.pattern.permute.xlu0 1
  %320 = vperm.xlu0 %319, %v160
  %v321 = vpop.permute.xlu0 %320
  %323 = vset.pattern.permute.xlu0 1
  %324 = vperm.xlu0 %323, %v161
  %v325 = vpop.permute.xlu0 %324
  %327 = vset.pattern.permute.xlu0 1
  %328 = vperm.xlu0 %327, %v162
  %v329 = vpop.permute.xlu0 %328
  %331 = vset.pattern.permute.xlu0 1
  %332 = vperm.xlu0 %331, %v163
  %v333 = vpop.permute.xlu0 %332
  %335 = vset.pattern.permute.xlu0 1
  %336 = vperm.xlu0 %335, %v164
  %v337 = vpop.permute.xlu0 %336
  %339 = vset.pattern.permute.xlu0 1
  %340 = vperm.xlu0 %339, %v165
  %v341 = vpop.permute.xlu0 %340
  %343 = vset.pattern.permute.xlu0 1
  %344 = vperm.xlu0 %343, %v166
  %v345 = vpop.permute.xlu0 %344
  %347 = vset.pattern.permute.xlu0 1
  %348 = vperm.xlu0 %347, %v167
  %v349 = vpop.permute.xlu0 %348
  %351 = vset.pattern.permute.xlu0 1
  %352 = vperm.xlu0 %351, %v168
  %v353 = vpop.permute.xlu0 %352
  %355 = vset.pattern.permute.xlu0 1
  %356 = vperm.xlu0 %355, %v169
  %v357 = vpop.permute.xlu0 %356
  %359 = vset.pattern.permute.xlu0 1
  %360 = vperm.xlu0 %359, %v170
  %v361 = vpop.permute.xlu0 %360
  %v363 = vperm.slane %v108, 1
  %v364 = vperm.slane %v111, 1
  %v365 = vperm.slane %v114, 1
  %v366 = vperm.slane %v117, 1
  %v367 = vperm.slane %v120, 1
  %v368 = vperm.slane %v123, 1
  %v369 = vperm.slane %v126, 1
  %v370 = vperm.slane %v129, 1
  %v371 = vperm.slane %v132, 1
  %v372 = vperm.slane %v135, 1
  %v373 = vperm.slane %v138, 1
  %v374 = vperm.slane %v141, 1
  %v375 = vperm.slane %v144, 1
  %v376 = vperm.slane %v147, 1
  %v377 = vperm.slane %v150, 1
  %v378 = vperm.slane %v153, 1
  %v379 = vmul.f32 %v301, %v363
  %v380 = vmul.f32 %v305, %v364
  %v381 = vmul.f32 %v309, %v365
  %v382 = vmul.f32 %v313, %v366
  %v383 = vmul.f32 %v317, %v367
  %v384 = vmul.f32 %v321, %v368
  %v385 = vmul.f32 %v325, %v369
  %v386 = vmul.f32 %v329, %v370
  %v387 = vmul.f32 %v333, %v371
  %v388 = vmul.f32 %v337, %v372
  %v389 = vmul.f32 %v341, %v373
  %v390 = vmul.f32 %v345, %v374
  %v391 = vmul.f32 %v349, %v375
  %v392 = vmul.f32 %v353, %v376
  %v393 = vmul.f32 %v357, %v377
  %v394 = vmul.f32 %v361, %v378
  %v395 = vadd.f32 %v283, %v379
  %v396 = vadd.f32 %v284, %v380
  %v397 = vadd.f32 %v285, %v381
  %v398 = vadd.f32 %v286, %v382
  %v399 = vadd.f32 %v287, %v383
  %v400 = vadd.f32 %v288, %v384
  %v401 = vadd.f32 %v289, %v385
  %v402 = vadd.f32 %v290, %v386
  %v403 = vadd.f32 %v291, %v387
  %v404 = vadd.f32 %v292, %v388
  %v405 = vadd.f32 %v293, %v389
  %v406 = vadd.f32 %v294, %v390
  %v407 = vadd.f32 %v295, %v391
  %v408 = vadd.f32 %v296, %v392
  %v409 = vadd.f32 %v297, %v393
  %v410 = vadd.f32 %v298, %v394
  %411 = vset.pattern.permute.xlu0 2
  %412 = vperm.xlu0 %411, %v155
  %v413 = vpop.permute.xlu0 %412
  %415 = vset.pattern.permute.xlu0 2
  %416 = vperm.xlu0 %415, %v156
  %v417 = vpop.permute.xlu0 %416
  %419 = vset.pattern.permute.xlu0 2
  %420 = vperm.xlu0 %419, %v157
  %v421 = vpop.permute.xlu0 %420
  %423 = vset.pattern.permute.xlu0 2
  %424 = vperm.xlu0 %423, %v158
  %v425 = vpop.permute.xlu0 %424
  %427 = vset.pattern.permute.xlu0 2
  %428 = vperm.xlu0 %427, %v159
  %v429 = vpop.permute.xlu0 %428
  %431 = vset.pattern.permute.xlu0 2
  %432 = vperm.xlu0 %431, %v160
  %v433 = vpop.permute.xlu0 %432
  %435 = vset.pattern.permute.xlu0 2
  %436 = vperm.xlu0 %435, %v161
  %v437 = vpop.permute.xlu0 %436
  %439 = vset.pattern.permute.xlu0 2
  %440 = vperm.xlu0 %439, %v162
  %v441 = vpop.permute.xlu0 %440
  %443 = vset.pattern.permute.xlu0 2
  %444 = vperm.xlu0 %443, %v163
  %v445 = vpop.permute.xlu0 %444
  %447 = vset.pattern.permute.xlu0 2
  %448 = vperm.xlu0 %447, %v164
  %v449 = vpop.permute.xlu0 %448
  %451 = vset.pattern.permute.xlu0 2
  %452 = vperm.xlu0 %451, %v165
  %v453 = vpop.permute.xlu0 %452
  %455 = vset.pattern.permute.xlu0 2
  %456 = vperm.xlu0 %455, %v166
  %v457 = vpop.permute.xlu0 %456
  %459 = vset.pattern.permute.xlu0 2
  %460 = vperm.xlu0 %459, %v167
  %v461 = vpop.permute.xlu0 %460
  %463 = vset.pattern.permute.xlu0 2
  %464 = vperm.xlu0 %463, %v168
  %v465 = vpop.permute.xlu0 %464
  %467 = vset.pattern.permute.xlu0 2
  %468 = vperm.xlu0 %467, %v169
  %v469 = vpop.permute.xlu0 %468
  %471 = vset.pattern.permute.xlu0 2
  %472 = vperm.xlu0 %471, %v170
  %v473 = vpop.permute.xlu0 %472
  %v475 = vperm.slane %v108, 2
  %v476 = vperm.slane %v111, 2
  %v477 = vperm.slane %v114, 2
  %v478 = vperm.slane %v117, 2
  %v479 = vperm.slane %v120, 2
  %v480 = vperm.slane %v123, 2
  %v481 = vperm.slane %v126, 2
  %v482 = vperm.slane %v129, 2
  %v483 = vperm.slane %v132, 2
  %v484 = vperm.slane %v135, 2
  %v485 = vperm.slane %v138, 2
  %v486 = vperm.slane %v141, 2
  %v487 = vperm.slane %v144, 2
  %v488 = vperm.slane %v147, 2
  %v489 = vperm.slane %v150, 2
  %v490 = vperm.slane %v153, 2
  %v491 = vmul.f32 %v413, %v475
  %v492 = vmul.f32 %v417, %v476
  %v493 = vmul.f32 %v421, %v477
  %v494 = vmul.f32 %v425, %v478
  %v495 = vmul.f32 %v429, %v479
  %v496 = vmul.f32 %v433, %v480
  %v497 = vmul.f32 %v437, %v481
  %v498 = vmul.f32 %v441, %v482
  %v499 = vmul.f32 %v445, %v483
  %v500 = vmul.f32 %v449, %v484
  %v501 = vmul.f32 %v453, %v485
  %v502 = vmul.f32 %v457, %v486
  %v503 = vmul.f32 %v461, %v487
  %v504 = vmul.f32 %v465, %v488
  %v505 = vmul.f32 %v469, %v489
  %v506 = vmul.f32 %v473, %v490
  %v507 = vadd.f32 %v395, %v491
  %v508 = vadd.f32 %v396, %v492
  %v509 = vadd.f32 %v397, %v493
  %v510 = vadd.f32 %v398, %v494
  %v511 = vadd.f32 %v399, %v495
  %v512 = vadd.f32 %v400, %v496
  %v513 = vadd.f32 %v401, %v497
  %v514 = vadd.f32 %v402, %v498
  %v515 = vadd.f32 %v403, %v499
  %v516 = vadd.f32 %v404, %v500
  %v517 = vadd.f32 %v405, %v501
  %v518 = vadd.f32 %v406, %v502
  %v519 = vadd.f32 %v407, %v503
  %v520 = vadd.f32 %v408, %v504
  %v521 = vadd.f32 %v409, %v505
  %v522 = vadd.f32 %v410, %v506
  %523 = vset.pattern.permute.xlu0 3
  %524 = vperm.xlu0 %523, %v155
  %v525 = vpop.permute.xlu0 %524
  %527 = vset.pattern.permute.xlu0 3
  %528 = vperm.xlu0 %527, %v156
  %v529 = vpop.permute.xlu0 %528
  %531 = vset.pattern.permute.xlu0 3
  %532 = vperm.xlu0 %531, %v157
  %v533 = vpop.permute.xlu0 %532
  %535 = vset.pattern.permute.xlu0 3
  %536 = vperm.xlu0 %535, %v158
  %v537 = vpop.permute.xlu0 %536
  %539 = vset.pattern.permute.xlu0 3
  %540 = vperm.xlu0 %539, %v159
  %v541 = vpop.permute.xlu0 %540
  %543 = vset.pattern.permute.xlu0 3
  %544 = vperm.xlu0 %543, %v160
  %v545 = vpop.permute.xlu0 %544
  %547 = vset.pattern.permute.xlu0 3
  %548 = vperm.xlu0 %547, %v161
  %v549 = vpop.permute.xlu0 %548
  %551 = vset.pattern.permute.xlu0 3
  %552 = vperm.xlu0 %551, %v162
  %v553 = vpop.permute.xlu0 %552
  %555 = vset.pattern.permute.xlu0 3
  %556 = vperm.xlu0 %555, %v163
  %v557 = vpop.permute.xlu0 %556
  %559 = vset.pattern.permute.xlu0 3
  %560 = vperm.xlu0 %559, %v164
  %v561 = vpop.permute.xlu0 %560
  %563 = vset.pattern.permute.xlu0 3
  %564 = vperm.xlu0 %563, %v165
  %v565 = vpop.permute.xlu0 %564
  %567 = vset.pattern.permute.xlu0 3
  %568 = vperm.xlu0 %567, %v166
  %v569 = vpop.permute.xlu0 %568
  %571 = vset.pattern.permute.xlu0 3
  %572 = vperm.xlu0 %571, %v167
  %v573 = vpop.permute.xlu0 %572
  %575 = vset.pattern.permute.xlu0 3
  %576 = vperm.xlu0 %575, %v168
  %v577 = vpop.permute.xlu0 %576
  %579 = vset.pattern.permute.xlu0 3
  %580 = vperm.xlu0 %579, %v169
  %v581 = vpop.permute.xlu0 %580
  %583 = vset.pattern.permute.xlu0 3
  %584 = vperm.xlu0 %583, %v170
  %v585 = vpop.permute.xlu0 %584
  %v587 = vperm.slane %v108, 3
  %v588 = vperm.slane %v111, 3
  %v589 = vperm.slane %v114, 3
  %v590 = vperm.slane %v117, 3
  %v591 = vperm.slane %v120, 3
  %v592 = vperm.slane %v123, 3
  %v593 = vperm.slane %v126, 3
  %v594 = vperm.slane %v129, 3
  %v595 = vperm.slane %v132, 3
  %v596 = vperm.slane %v135, 3
  %v597 = vperm.slane %v138, 3
  %v598 = vperm.slane %v141, 3
  %v599 = vperm.slane %v144, 3
  %v600 = vperm.slane %v147, 3
  %v601 = vperm.slane %v150, 3
  %v602 = vperm.slane %v153, 3
  %v603 = vmul.f32 %v525, %v587
  %v604 = vmul.f32 %v529, %v588
  %v605 = vmul.f32 %v533, %v589
  %v606 = vmul.f32 %v537, %v590
  %v607 = vmul.f32 %v541, %v591
  %v608 = vmul.f32 %v545, %v592
  %v609 = vmul.f32 %v549, %v593
  %v610 = vmul.f32 %v553, %v594
  %v611 = vmul.f32 %v557, %v595
  %v612 = vmul.f32 %v561, %v596
  %v613 = vmul.f32 %v565, %v597
  %v614 = vmul.f32 %v569, %v598
  %v615 = vmul.f32 %v573, %v599
  %v616 = vmul.f32 %v577, %v600
  %v617 = vmul.f32 %v581, %v601
  %v618 = vmul.f32 %v585, %v602
  %v619 = vadd.f32 %v507, %v603
  %v620 = vadd.f32 %v508, %v604
  %v621 = vadd.f32 %v509, %v605
  %v622 = vadd.f32 %v510, %v606
  %v623 = vadd.f32 %v511, %v607
  %v624 = vadd.f32 %v512, %v608
  %v625 = vadd.f32 %v513, %v609
  %v626 = vadd.f32 %v514, %v610
  %v627 = vadd.f32 %v515, %v611
  %v628 = vadd.f32 %v516, %v612
  %v629 = vadd.f32 %v517, %v613
  %v630 = vadd.f32 %v518, %v614
  %v631 = vadd.f32 %v519, %v615
  %v632 = vadd.f32 %v520, %v616
  %v633 = vadd.f32 %v521, %v617
  %v634 = vadd.f32 %v522, %v618
  %635 = vset.pattern.permute.xlu0 4
  %636 = vperm.xlu0 %635, %v155
  %v637 = vpop.permute.xlu0 %636
  %639 = vset.pattern.permute.xlu0 4
  %640 = vperm.xlu0 %639, %v156
  %v641 = vpop.permute.xlu0 %640
  %643 = vset.pattern.permute.xlu0 4
  %644 = vperm.xlu0 %643, %v157
  %v645 = vpop.permute.xlu0 %644
  %647 = vset.pattern.permute.xlu0 4
  %648 = vperm.xlu0 %647, %v158
  %v649 = vpop.permute.xlu0 %648
  %651 = vset.pattern.permute.xlu0 4
  %652 = vperm.xlu0 %651, %v159
  %v653 = vpop.permute.xlu0 %652
  %655 = vset.pattern.permute.xlu0 4
  %656 = vperm.xlu0 %655, %v160
  %v657 = vpop.permute.xlu0 %656
  %659 = vset.pattern.permute.xlu0 4
  %660 = vperm.xlu0 %659, %v161
  %v661 = vpop.permute.xlu0 %660
  %663 = vset.pattern.permute.xlu0 4
  %664 = vperm.xlu0 %663, %v162
  %v665 = vpop.permute.xlu0 %664
  %667 = vset.pattern.permute.xlu0 4
  %668 = vperm.xlu0 %667, %v163
  %v669 = vpop.permute.xlu0 %668
  %671 = vset.pattern.permute.xlu0 4
  %672 = vperm.xlu0 %671, %v164
  %v673 = vpop.permute.xlu0 %672
  %675 = vset.pattern.permute.xlu0 4
  %676 = vperm.xlu0 %675, %v165
  %v677 = vpop.permute.xlu0 %676
  %679 = vset.pattern.permute.xlu0 4
  %680 = vperm.xlu0 %679, %v166
  %v681 = vpop.permute.xlu0 %680
  %683 = vset.pattern.permute.xlu0 4
  %684 = vperm.xlu0 %683, %v167
  %v685 = vpop.permute.xlu0 %684
  %687 = vset.pattern.permute.xlu0 4
  %688 = vperm.xlu0 %687, %v168
  %v689 = vpop.permute.xlu0 %688
  %691 = vset.pattern.permute.xlu0 4
  %692 = vperm.xlu0 %691, %v169
  %v693 = vpop.permute.xlu0 %692
  %695 = vset.pattern.permute.xlu0 4
  %696 = vperm.xlu0 %695, %v170
  %v697 = vpop.permute.xlu0 %696
  %v699 = vperm.slane %v108, 4
  %v700 = vperm.slane %v111, 4
  %v701 = vperm.slane %v114, 4
  %v702 = vperm.slane %v117, 4
  %v703 = vperm.slane %v120, 4
  %v704 = vperm.slane %v123, 4
  %v705 = vperm.slane %v126, 4
  %v706 = vperm.slane %v129, 4
  %v707 = vperm.slane %v132, 4
  %v708 = vperm.slane %v135, 4
  %v709 = vperm.slane %v138, 4
  %v710 = vperm.slane %v141, 4
  %v711 = vperm.slane %v144, 4
  %v712 = vperm.slane %v147, 4
  %v713 = vperm.slane %v150, 4
  %v714 = vperm.slane %v153, 4
  %v715 = vmul.f32 %v637, %v699
  %v716 = vmul.f32 %v641, %v700
  %v717 = vmul.f32 %v645, %v701
  %v718 = vmul.f32 %v649, %v702
  %v719 = vmul.f32 %v653, %v703
  %v720 = vmul.f32 %v657, %v704
  %v721 = vmul.f32 %v661, %v705
  %v722 = vmul.f32 %v665, %v706
  %v723 = vmul.f32 %v669, %v707
  %v724 = vmul.f32 %v673, %v708
  %v725 = vmul.f32 %v677, %v709
  %v726 = vmul.f32 %v681, %v710
  %v727 = vmul.f32 %v685, %v711
  %v728 = vmul.f32 %v689, %v712
  %v729 = vmul.f32 %v693, %v713
  %v730 = vmul.f32 %v697, %v714
  %v731 = vadd.f32 %v619, %v715
  %v732 = vadd.f32 %v620, %v716
  %v733 = vadd.f32 %v621, %v717
  %v734 = vadd.f32 %v622, %v718
  %v735 = vadd.f32 %v623, %v719
  %v736 = vadd.f32 %v624, %v720
  %v737 = vadd.f32 %v625, %v721
  %v738 = vadd.f32 %v626, %v722
  %v739 = vadd.f32 %v627, %v723
  %v740 = vadd.f32 %v628, %v724
  %v741 = vadd.f32 %v629, %v725
  %v742 = vadd.f32 %v630, %v726
  %v743 = vadd.f32 %v631, %v727
  %v744 = vadd.f32 %v632, %v728
  %v745 = vadd.f32 %v633, %v729
  %v746 = vadd.f32 %v634, %v730
  %747 = vset.pattern.permute.xlu0 5
  %748 = vperm.xlu0 %747, %v155
  %v749 = vpop.permute.xlu0 %748
  %751 = vset.pattern.permute.xlu0 5
  %752 = vperm.xlu0 %751, %v156
  %v753 = vpop.permute.xlu0 %752
  %755 = vset.pattern.permute.xlu0 5
  %756 = vperm.xlu0 %755, %v157
  %v757 = vpop.permute.xlu0 %756
  %759 = vset.pattern.permute.xlu0 5
  %760 = vperm.xlu0 %759, %v158
  %v761 = vpop.permute.xlu0 %760
  %763 = vset.pattern.permute.xlu0 5
  %764 = vperm.xlu0 %763, %v159
  %v765 = vpop.permute.xlu0 %764
  %767 = vset.pattern.permute.xlu0 5
  %768 = vperm.xlu0 %767, %v160
  %v769 = vpop.permute.xlu0 %768
  %771 = vset.pattern.permute.xlu0 5
  %772 = vperm.xlu0 %771, %v161
  %v773 = vpop.permute.xlu0 %772
  %775 = vset.pattern.permute.xlu0 5
  %776 = vperm.xlu0 %775, %v162
  %v777 = vpop.permute.xlu0 %776
  %779 = vset.pattern.permute.xlu0 5
  %780 = vperm.xlu0 %779, %v163
  %v781 = vpop.permute.xlu0 %780
  %783 = vset.pattern.permute.xlu0 5
  %784 = vperm.xlu0 %783, %v164
  %v785 = vpop.permute.xlu0 %784
  %787 = vset.pattern.permute.xlu0 5
  %788 = vperm.xlu0 %787, %v165
  %v789 = vpop.permute.xlu0 %788
  %791 = vset.pattern.permute.xlu0 5
  %792 = vperm.xlu0 %791, %v166
  %v793 = vpop.permute.xlu0 %792
  %795 = vset.pattern.permute.xlu0 5
  %796 = vperm.xlu0 %795, %v167
  %v797 = vpop.permute.xlu0 %796
  %799 = vset.pattern.permute.xlu0 5
  %800 = vperm.xlu0 %799, %v168
  %v801 = vpop.permute.xlu0 %800
  %803 = vset.pattern.permute.xlu0 5
  %804 = vperm.xlu0 %803, %v169
  %v805 = vpop.permute.xlu0 %804
  %807 = vset.pattern.permute.xlu0 5
  %808 = vperm.xlu0 %807, %v170
  %v809 = vpop.permute.xlu0 %808
  %v811 = vperm.slane %v108, 5
  %v812 = vperm.slane %v111, 5
  %v813 = vperm.slane %v114, 5
  %v814 = vperm.slane %v117, 5
  %v815 = vperm.slane %v120, 5
  %v816 = vperm.slane %v123, 5
  %v817 = vperm.slane %v126, 5
  %v818 = vperm.slane %v129, 5
  %v819 = vperm.slane %v132, 5
  %v820 = vperm.slane %v135, 5
  %v821 = vperm.slane %v138, 5
  %v822 = vperm.slane %v141, 5
  %v823 = vperm.slane %v144, 5
  %v824 = vperm.slane %v147, 5
  %v825 = vperm.slane %v150, 5
  %v826 = vperm.slane %v153, 5
  %v827 = vmul.f32 %v749, %v811
  %v828 = vmul.f32 %v753, %v812
  %v829 = vmul.f32 %v757, %v813
  %v830 = vmul.f32 %v761, %v814
  %v831 = vmul.f32 %v765, %v815
  %v832 = vmul.f32 %v769, %v816
  %v833 = vmul.f32 %v773, %v817
  %v834 = vmul.f32 %v777, %v818
  %v835 = vmul.f32 %v781, %v819
  %v836 = vmul.f32 %v785, %v820
  %v837 = vmul.f32 %v789, %v821
  %v838 = vmul.f32 %v793, %v822
  %v839 = vmul.f32 %v797, %v823
  %v840 = vmul.f32 %v801, %v824
  %v841 = vmul.f32 %v805, %v825
  %v842 = vmul.f32 %v809, %v826
  %v843 = vadd.f32 %v731, %v827
  %v844 = vadd.f32 %v732, %v828
  %v845 = vadd.f32 %v733, %v829
  %v846 = vadd.f32 %v734, %v830
  %v847 = vadd.f32 %v735, %v831
  %v848 = vadd.f32 %v736, %v832
  %v849 = vadd.f32 %v737, %v833
  %v850 = vadd.f32 %v738, %v834
  %v851 = vadd.f32 %v739, %v835
  %v852 = vadd.f32 %v740, %v836
  %v853 = vadd.f32 %v741, %v837
  %v854 = vadd.f32 %v742, %v838
  %v855 = vadd.f32 %v743, %v839
  %v856 = vadd.f32 %v744, %v840
  %v857 = vadd.f32 %v745, %v841
  %v858 = vadd.f32 %v746, %v842
  %859 = vset.pattern.permute.xlu0 6
  %860 = vperm.xlu0 %859, %v155
  %v861 = vpop.permute.xlu0 %860
  %863 = vset.pattern.permute.xlu0 6
  %864 = vperm.xlu0 %863, %v156
  %v865 = vpop.permute.xlu0 %864
  %867 = vset.pattern.permute.xlu0 6
  %868 = vperm.xlu0 %867, %v157
  %v869 = vpop.permute.xlu0 %868
  %871 = vset.pattern.permute.xlu0 6
  %872 = vperm.xlu0 %871, %v158
  %v873 = vpop.permute.xlu0 %872
  %875 = vset.pattern.permute.xlu0 6
  %876 = vperm.xlu0 %875, %v159
  %v877 = vpop.permute.xlu0 %876
  %879 = vset.pattern.permute.xlu0 6
  %880 = vperm.xlu0 %879, %v160
  %v881 = vpop.permute.xlu0 %880
  %883 = vset.pattern.permute.xlu0 6
  %884 = vperm.xlu0 %883, %v161
  %v885 = vpop.permute.xlu0 %884
  %887 = vset.pattern.permute.xlu0 6
  %888 = vperm.xlu0 %887, %v162
  %v889 = vpop.permute.xlu0 %888
  %891 = vset.pattern.permute.xlu0 6
  %892 = vperm.xlu0 %891, %v163
  %v893 = vpop.permute.xlu0 %892
  %895 = vset.pattern.permute.xlu0 6
  %896 = vperm.xlu0 %895, %v164
  %v897 = vpop.permute.xlu0 %896
  %899 = vset.pattern.permute.xlu0 6
  %900 = vperm.xlu0 %899, %v165
  %v901 = vpop.permute.xlu0 %900
  %903 = vset.pattern.permute.xlu0 6
  %904 = vperm.xlu0 %903, %v166
  %v905 = vpop.permute.xlu0 %904
  %907 = vset.pattern.permute.xlu0 6
  %908 = vperm.xlu0 %907, %v167
  %v909 = vpop.permute.xlu0 %908
  %911 = vset.pattern.permute.xlu0 6
  %912 = vperm.xlu0 %911, %v168
  %v913 = vpop.permute.xlu0 %912
  %915 = vset.pattern.permute.xlu0 6
  %916 = vperm.xlu0 %915, %v169
  %v917 = vpop.permute.xlu0 %916
  %919 = vset.pattern.permute.xlu0 6
  %920 = vperm.xlu0 %919, %v170
  %v921 = vpop.permute.xlu0 %920
  %v923 = vperm.slane %v108, 6
  %v924 = vperm.slane %v111, 6
  %v925 = vperm.slane %v114, 6
  %v926 = vperm.slane %v117, 6
  %v927 = vperm.slane %v120, 6
  %v928 = vperm.slane %v123, 6
  %v929 = vperm.slane %v126, 6
  %v930 = vperm.slane %v129, 6
  %v931 = vperm.slane %v132, 6
  %v932 = vperm.slane %v135, 6
  %v933 = vperm.slane %v138, 6
  %v934 = vperm.slane %v141, 6
  %v935 = vperm.slane %v144, 6
  %v936 = vperm.slane %v147, 6
  %v937 = vperm.slane %v150, 6
  %v938 = vperm.slane %v153, 6
  %v939 = vmul.f32 %v861, %v923
  %v940 = vmul.f32 %v865, %v924
  %v941 = vmul.f32 %v869, %v925
  %v942 = vmul.f32 %v873, %v926
  %v943 = vmul.f32 %v877, %v927
  %v944 = vmul.f32 %v881, %v928
  %v945 = vmul.f32 %v885, %v929
  %v946 = vmul.f32 %v889, %v930
  %v947 = vmul.f32 %v893, %v931
  %v948 = vmul.f32 %v897, %v932
  %v949 = vmul.f32 %v901, %v933
  %v950 = vmul.f32 %v905, %v934
  %v951 = vmul.f32 %v909, %v935
  %v952 = vmul.f32 %v913, %v936
  %v953 = vmul.f32 %v917, %v937
  %v954 = vmul.f32 %v921, %v938
  %v955 = vadd.f32 %v843, %v939
  %v956 = vadd.f32 %v844, %v940
  %v957 = vadd.f32 %v845, %v941
  %v958 = vadd.f32 %v846, %v942
  %v959 = vadd.f32 %v847, %v943
  %v960 = vadd.f32 %v848, %v944
  %v961 = vadd.f32 %v849, %v945
  %v962 = vadd.f32 %v850, %v946
  %v963 = vadd.f32 %v851, %v947
  %v964 = vadd.f32 %v852, %v948
  %v965 = vadd.f32 %v853, %v949
  %v966 = vadd.f32 %v854, %v950
  %v967 = vadd.f32 %v855, %v951
  %v968 = vadd.f32 %v856, %v952
  %v969 = vadd.f32 %v857, %v953
  %v970 = vadd.f32 %v858, %v954
  %971 = vset.pattern.permute.xlu0 7
  %972 = vperm.xlu0 %971, %v155
  %v973 = vpop.permute.xlu0 %972
  %975 = vset.pattern.permute.xlu0 7
  %976 = vperm.xlu0 %975, %v156
  %v977 = vpop.permute.xlu0 %976
  %979 = vset.pattern.permute.xlu0 7
  %980 = vperm.xlu0 %979, %v157
  %v981 = vpop.permute.xlu0 %980
  %983 = vset.pattern.permute.xlu0 7
  %984 = vperm.xlu0 %983, %v158
  %v985 = vpop.permute.xlu0 %984
  %987 = vset.pattern.permute.xlu0 7
  %988 = vperm.xlu0 %987, %v159
  %v989 = vpop.permute.xlu0 %988
  %991 = vset.pattern.permute.xlu0 7
  %992 = vperm.xlu0 %991, %v160
  %v993 = vpop.permute.xlu0 %992
  %995 = vset.pattern.permute.xlu0 7
  %996 = vperm.xlu0 %995, %v161
  %v997 = vpop.permute.xlu0 %996
  %999 = vset.pattern.permute.xlu0 7
  %1000 = vperm.xlu0 %999, %v162
  %v1001 = vpop.permute.xlu0 %1000
  %1003 = vset.pattern.permute.xlu0 7
  %1004 = vperm.xlu0 %1003, %v163
  %v1005 = vpop.permute.xlu0 %1004
  %1007 = vset.pattern.permute.xlu0 7
  %1008 = vperm.xlu0 %1007, %v164
  %v1009 = vpop.permute.xlu0 %1008
  %1011 = vset.pattern.permute.xlu0 7
  %1012 = vperm.xlu0 %1011, %v165
  %v1013 = vpop.permute.xlu0 %1012
  %1015 = vset.pattern.permute.xlu0 7
  %1016 = vperm.xlu0 %1015, %v166
  %v1017 = vpop.permute.xlu0 %1016
  %1019 = vset.pattern.permute.xlu0 7
  %1020 = vperm.xlu0 %1019, %v167
  %v1021 = vpop.permute.xlu0 %1020
  %1023 = vset.pattern.permute.xlu0 7
  %1024 = vperm.xlu0 %1023, %v168
  %v1025 = vpop.permute.xlu0 %1024
  %1027 = vset.pattern.permute.xlu0 7
  %1028 = vperm.xlu0 %1027, %v169
  %v1029 = vpop.permute.xlu0 %1028
  %1031 = vset.pattern.permute.xlu0 7
  %1032 = vperm.xlu0 %1031, %v170
  %v1033 = vpop.permute.xlu0 %1032
  %v1035 = vperm.slane %v108, 7
  %v1036 = vperm.slane %v111, 7
  %v1037 = vperm.slane %v114, 7
  %v1038 = vperm.slane %v117, 7
  %v1039 = vperm.slane %v120, 7
  %v1040 = vperm.slane %v123, 7
  %v1041 = vperm.slane %v126, 7
  %v1042 = vperm.slane %v129, 7
  %v1043 = vperm.slane %v132, 7
  %v1044 = vperm.slane %v135, 7
  %v1045 = vperm.slane %v138, 7
  %v1046 = vperm.slane %v141, 7
  %v1047 = vperm.slane %v144, 7
  %v1048 = vperm.slane %v147, 7
  %v1049 = vperm.slane %v150, 7
  %v1050 = vperm.slane %v153, 7
  %v1051 = vmul.f32 %v973, %v1035
  %v1052 = vmul.f32 %v977, %v1036
  %v1053 = vmul.f32 %v981, %v1037
  %v1054 = vmul.f32 %v985, %v1038
  %v1055 = vmul.f32 %v989, %v1039
  %v1056 = vmul.f32 %v993, %v1040
  %v1057 = vmul.f32 %v997, %v1041
  %v1058 = vmul.f32 %v1001, %v1042
  %v1059 = vmul.f32 %v1005, %v1043
  %v1060 = vmul.f32 %v1009, %v1044
  %v1061 = vmul.f32 %v1013, %v1045
  %v1062 = vmul.f32 %v1017, %v1046
  %v1063 = vmul.f32 %v1021, %v1047
  %v1064 = vmul.f32 %v1025, %v1048
  %v1065 = vmul.f32 %v1029, %v1049
  %v1066 = vmul.f32 %v1033, %v1050
  %v1067 = vadd.f32 %v955, %v1051
  %v1068 = vadd.f32 %v956, %v1052
  %v1069 = vadd.f32 %v957, %v1053
  %v1070 = vadd.f32 %v958, %v1054
  %v1071 = vadd.f32 %v959, %v1055
  %v1072 = vadd.f32 %v960, %v1056
  %v1073 = vadd.f32 %v961, %v1057
  %v1074 = vadd.f32 %v962, %v1058
  %v1075 = vadd.f32 %v963, %v1059
  %v1076 = vadd.f32 %v964, %v1060
  %v1077 = vadd.f32 %v965, %v1061
  %v1078 = vadd.f32 %v966, %v1062
  %v1079 = vadd.f32 %v967, %v1063
  %v1080 = vadd.f32 %v968, %v1064
  %v1081 = vadd.f32 %v969, %v1065
  %v1082 = vadd.f32 %v970, %v1066
  %v1083 = vld [vmem:[%s3] sm:$0x1]
  %v1085 = vperm.slane %v1083, 0
  %v1087 = vadd.f32 %v1067, %v1085
  %v1088 = vadd.f32 %v1068, %v1085
  %v1089 = vadd.f32 %v1069, %v1085
  %v1090 = vadd.f32 %v1070, %v1085
  %v1091 = vadd.f32 %v1071, %v1085
  %v1092 = vadd.f32 %v1072, %v1085
  %v1093 = vadd.f32 %v1073, %v1085
  %v1094 = vadd.f32 %v1074, %v1085
  %v1095 = vadd.f32 %v1075, %v1085
  %v1096 = vadd.f32 %v1076, %v1085
  %v1097 = vadd.f32 %v1077, %v1085
  %v1098 = vadd.f32 %v1078, %v1085
  %v1099 = vadd.f32 %v1079, %v1085
  %v1100 = vadd.f32 %v1080, %v1085
  %v1101 = vadd.f32 %v1081, %v1085
  %v1102 = vadd.f32 %v1082, %v1085
  %v1103 = vmax.f32 %v1087, 0.0
  %v1104 = vmax.f32 %v1088, 0.0
  %v1105 = vmax.f32 %v1089, 0.0
  %v1106 = vmax.f32 %v1090, 0.0
  %v1107 = vmax.f32 %v1091, 0.0
  %v1108 = vmax.f32 %v1092, 0.0
  %v1109 = vmax.f32 %v1093, 0.0
  %v1110 = vmax.f32 %v1094, 0.0
  %v1111 = vmax.f32 %v1095, 0.0
  %v1112 = vmax.f32 %v1096, 0.0
  %v1113 = vmax.f32 %v1097, 0.0
  %v1114 = vmax.f32 %v1098, 0.0
  %v1115 = vmax.f32 %v1099, 0.0
  %v1116 = vmax.f32 %v1100, 0.0
  %v1117 = vmax.f32 %v1101, 0.0
  %v1118 = vmax.f32 %v1102, 0.0
  %v1119 = vrot.slane %v1105, 4
  %vm1120 = vcmask 1047556
  %v1121 = vsel %vm1120, %v1119, %v1103
  %v1122 = vrot.slane %v1103, 4
  %v1123 = vsel %vm1120, %v1105, %v1122
  %v1125 = vunpack.c.l.s4 1983009808
  %v1126 = vunpack.c.0.s8 %v1125
  %v1127 = vperm.slane %v1121, %v1126
  %v1129 = vunpack.c.l.s4 1983009808
  %v1130 = vunpack.c.0.s8 %v1129
  %v1131 = vperm.slane %v1123, %v1130
  %v1132 = vrot.slane %v1106, 4
  %v1133 = vsel %vm1120, %v1132, %v1104
  %v1134 = vrot.slane %v1104, 4
  %v1135 = vsel %vm1120, %v1106, %v1134
  %v1137 = vunpack.c.l.s4 1983009808
  %v1138 = vunpack.c.0.s8 %v1137
  %v1139 = vperm.slane %v1133, %v1138
  %v1141 = vunpack.c.l.s4 1983009808
  %v1142 = vunpack.c.0.s8 %v1141
  %v1143 = vperm.slane %v1135, %v1142
  %v1144 = vrot.slane %v1109, 4
  %v1145 = vsel %vm1120, %v1144, %v1107
  %v1146 = vrot.slane %v1107, 4
  %v1147 = vsel %vm1120, %v1109, %v1146
  %v1149 = vunpack.c.l.s4 1983009808
  %v1150 = vunpack.c.0.s8 %v1149
  %v1151 = vperm.slane %v1145, %v1150
  %v1153 = vunpack.c.l.s4 1983009808
  %v1154 = vunpack.c.0.s8 %v1153
  %v1155 = vperm.slane %v1147, %v1154
  %v1156 = vrot.slane %v1110, 4
  %v1157 = vsel %vm1120, %v1156, %v1108
  %v1158 = vrot.slane %v1108, 4
  %v1159 = vsel %vm1120, %v1110, %v1158
  %v1161 = vunpack.c.l.s4 1983009808
  %v1162 = vunpack.c.0.s8 %v1161
  %v1163 = vperm.slane %v1157, %v1162
  %v1165 = vunpack.c.l.s4 1983009808
  %v1166 = vunpack.c.0.s8 %v1165
  %v1167 = vperm.slane %v1159, %v1166
  %v1168 = vrot.slane %v1139, 4
  %v1169 = vsel %vm1120, %v1168, %v1127
  %v1170 = vrot.slane %v1127, 4
  %v1171 = vsel %vm1120, %v1139, %v1170
  %v1173 = vunpack.c.l.s4 1934713408
  %v1174 = vunpack.c.0.s8 %v1173
  %v1175 = vperm.slane %v1169, %v1174
  %v1177 = vunpack.c.l.s4 1934713408
  %v1178 = vunpack.c.0.s8 %v1177
  %v1179 = vperm.slane %v1171, %v1178
  %v1180 = vrot.slane %v1143, 4
  %v1181 = vsel %vm1120, %v1180, %v1131
  %v1182 = vrot.slane %v1131, 4
  %v1183 = vsel %vm1120, %v1143, %v1182
  %v1185 = vunpack.c.l.s4 1934713408
  %v1186 = vunpack.c.0.s8 %v1185
  %v1187 = vperm.slane %v1181, %v1186
  %v1189 = vunpack.c.l.s4 1934713408
  %v1190 = vunpack.c.0.s8 %v1189
  %v1191 = vperm.slane %v1183, %v1190
  %v1192 = vrot.slane %v1163, 4
  %v1193 = vsel %vm1120, %v1192, %v1151
  %v1194 = vrot.slane %v1151, 4
  %v1195 = vsel %vm1120, %v1163, %v1194
  %v1197 = vunpack.c.l.s4 1934713408
  %v1198 = vunpack.c.0.s8 %v1197
  %v1199 = vperm.slane %v1193, %v1198
  %v1201 = vunpack.c.l.s4 1934713408
  %v1202 = vunpack.c.0.s8 %v1201
  %v1203 = vperm.slane %v1195, %v1202
  %v1204 = vrot.slane %v1167, 4
  %v1205 = vsel %vm1120, %v1204, %v1155
  %v1206 = vrot.slane %v1155, 4
  %v1207 = vsel %vm1120, %v1167, %v1206
  %v1209 = vunpack.c.l.s4 1934713408
  %v1210 = vunpack.c.0.s8 %v1209
  %v1211 = vperm.slane %v1205, %v1210
  %v1213 = vunpack.c.l.s4 1934713408
  %v1214 = vunpack.c.0.s8 %v1213
  %v1215 = vperm.slane %v1207, %v1214
  %v1216 = vrot.slane %v1199, 4
  %v1217 = vsel %vm1120, %v1216, %v1175
  %v1218 = vrot.slane %v1175, 4
  %v1219 = vsel %vm1120, %v1199, %v1218
  %v1220 = vrot.slane %v1203, 4
  %v1221 = vsel %vm1120, %v1220, %v1179
  %v1222 = vrot.slane %v1179, 4
  %v1223 = vsel %vm1120, %v1203, %v1222
  %v1224 = vrot.slane %v1211, 4
  %v1225 = vsel %vm1120, %v1224, %v1187
  %v1226 = vrot.slane %v1187, 4
  %v1227 = vsel %vm1120, %v1211, %v1226
  %v1228 = vrot.slane %v1215, 4
  %v1229 = vsel %vm1120, %v1228, %v1191
  %v1230 = vrot.slane %v1191, 4
  %v1231 = vsel %vm1120, %v1215, %v1230
  %v1232 = vrot.slane %v1113, 4
  %v1233 = vsel %vm1120, %v1232, %v1111
  %v1234 = vrot.slane %v1111, 4
  %v1235 = vsel %vm1120, %v1113, %v1234
  %v1237 = vunpack.c.l.s4 1983009808
  %v1238 = vunpack.c.0.s8 %v1237
  %v1239 = vperm.slane %v1233, %v1238
  %v1241 = vunpack.c.l.s4 1983009808
  %v1242 = vunpack.c.0.s8 %v1241
  %v1243 = vperm.slane %v1235, %v1242
  %v1244 = vrot.slane %v1114, 4
  %v1245 = vsel %vm1120, %v1244, %v1112
  %v1246 = vrot.slane %v1112, 4
  %v1247 = vsel %vm1120, %v1114, %v1246
  %v1249 = vunpack.c.l.s4 1983009808
  %v1250 = vunpack.c.0.s8 %v1249
  %v1251 = vperm.slane %v1245, %v1250
  %v1253 = vunpack.c.l.s4 1983009808
  %v1254 = vunpack.c.0.s8 %v1253
  %v1255 = vperm.slane %v1247, %v1254
  %v1256 = vrot.slane %v1117, 4
  %v1257 = vsel %vm1120, %v1256, %v1115
  %v1258 = vrot.slane %v1115, 4
  %v1259 = vsel %vm1120, %v1117, %v1258
  %v1261 = vunpack.c.l.s4 1983009808
  %v1262 = vunpack.c.0.s8 %v1261
  %v1263 = vperm.slane %v1257, %v1262
  %v1265 = vunpack.c.l.s4 1983009808
  %v1266 = vunpack.c.0.s8 %v1265
  %v1267 = vperm.slane %v1259, %v1266
  %v1268 = vrot.slane %v1118, 4
  %v1269 = vsel %vm1120, %v1268, %v1116
  %v1270 = vrot.slane %v1116, 4
  %v1271 = vsel %vm1120, %v1118, %v1270
  %v1273 = vunpack.c.l.s4 1983009808
  %v1274 = vunpack.c.0.s8 %v1273
  %v1275 = vperm.slane %v1269, %v1274
  %v1277 = vunpack.c.l.s4 1983009808
  %v1278 = vunpack.c.0.s8 %v1277
  %v1279 = vperm.slane %v1271, %v1278
  %v1280 = vrot.slane %v1251, 4
  %v1281 = vsel %vm1120, %v1280, %v1239
  %v1282 = vrot.slane %v1239, 4
  %v1283 = vsel %vm1120, %v1251, %v1282
  %v1285 = vunpack.c.l.s4 1934713408
  %v1286 = vunpack.c.0.s8 %v1285
  %v1287 = vperm.slane %v1281, %v1286
  %v1289 = vunpack.c.l.s4 1934713408
  %v1290 = vunpack.c.0.s8 %v1289
  %v1291 = vperm.slane %v1283, %v1290
  %v1292 = vrot.slane %v1255, 4
  %v1293 = vsel %vm1120, %v1292, %v1243
  %v1294 = vrot.slane %v1243, 4
  %v1295 = vsel %vm1120, %v1255, %v1294
  %v1297 = vunpack.c.l.s4 1934713408
  %v1298 = vunpack.c.0.s8 %v1297
  %v1299 = vperm.slane %v1293, %v1298
  %v1301 = vunpack.c.l.s4 1934713408
  %v1302 = vunpack.c.0.s8 %v1301
  %v1303 = vperm.slane %v1295, %v1302
  %v1304 = vrot.slane %v1275, 4
  %v1305 = vsel %vm1120, %v1304, %v1263
  %v1306 = vrot.slane %v1263, 4
  %v1307 = vsel %vm1120, %v1275, %v1306
  %v1309 = vunpack.c.l.s4 1934713408
  %v1310 = vunpack.c.0.s8 %v1309
  %v1311 = vperm.slane %v1305, %v1310
  %v1313 = vunpack.c.l.s4 1934713408
  %v1314 = vunpack.c.0.s8 %v1313
  %v1315 = vperm.slane %v1307, %v1314
  %v1316 = vrot.slane %v1279, 4
  %v1317 = vsel %vm1120, %v1316, %v1267
  %v1318 = vrot.slane %v1267, 4
  %v1319 = vsel %vm1120, %v1279, %v1318
  %v1321 = vunpack.c.l.s4 1934713408
  %v1322 = vunpack.c.0.s8 %v1321
  %v1323 = vperm.slane %v1317, %v1322
  %v1325 = vunpack.c.l.s4 1934713408
  %v1326 = vunpack.c.0.s8 %v1325
  %v1327 = vperm.slane %v1319, %v1326
  %v1328 = vrot.slane %v1311, 4
  %v1329 = vsel %vm1120, %v1328, %v1287
  %v1330 = vrot.slane %v1287, 4
  %v1331 = vsel %vm1120, %v1311, %v1330
  %v1332 = vrot.slane %v1315, 4
  %v1333 = vsel %vm1120, %v1332, %v1291
  %v1334 = vrot.slane %v1291, 4
  %v1335 = vsel %vm1120, %v1315, %v1334
  %v1336 = vrot.slane %v1323, 4
  %v1337 = vsel %vm1120, %v1336, %v1299
  %v1338 = vrot.slane %v1299, 4
  %v1339 = vsel %vm1120, %v1323, %v1338
  %v1340 = vrot.slane %v1327, 4
  %v1341 = vsel %vm1120, %v1340, %v1303
  %v1342 = vrot.slane %v1303, 4
  %v1343 = vsel %vm1120, %v1327, %v1342
  %1346 = vrot.lane.b32.xlu0 %v1219, 32
  %v1347 = vpop.permute.xlu0 %1346
  %1348 = vrot.lane.b32.xlu0 %v1331, 32
  %v1349 = vpop.permute.xlu0 %1348
  %1354 = vrot.lane.b32.xlu0 %v1221, 64
  %v1355 = vpop.permute.xlu0 %1354
  %1356 = vrot.lane.b32.xlu0 %v1333, 64
  %v1357 = vpop.permute.xlu0 %1356
  %1362 = vrot.lane.b32.xlu0 %v1223, 96
  %v1363 = vpop.permute.xlu0 %1362
  %1364 = vrot.lane.b32.xlu0 %v1335, 96
  %v1365 = vpop.permute.xlu0 %1364
  %1370 = vrot.lane.b32.xlu0 %v1227, 32
  %v1371 = vpop.permute.xlu0 %1370
  %1372 = vrot.lane.b32.xlu0 %v1339, 32
  %v1373 = vpop.permute.xlu0 %1372
  %1378 = vrot.lane.b32.xlu0 %v1229, 64
  %v1379 = vpop.permute.xlu0 %1378
  %1380 = vrot.lane.b32.xlu0 %v1341, 64
  %v1381 = vpop.permute.xlu0 %1380
  %1386 = vrot.lane.b32.xlu0 %v1231, 96
  %v1387 = vpop.permute.xlu0 %1386
  %1388 = vrot.lane.b32.xlu0 %v1343, 96
  %v1389 = vpop.permute.xlu0 %1388
  %vm1392 = vcmask 261120
  %v1393 = vsel %vm1392, %v1217, %v1347
  %v1394 = vsel %vm1392, %v1329, %v1349
  %vm1395 = vcmask 523264
  %v1396 = vsel %vm1395, %v1393, %v1355
  %v1397 = vsel %vm1395, %v1394, %v1357
  %vm1398 = vcmask 785408
  %v1399 = vsel %vm1398, %v1396, %v1363
  %v1400 = vsel %vm1398, %v1397, %v1365
  %v1401 = vsel %vm1392, %v1225, %v1371
  %v1402 = vsel %vm1392, %v1337, %v1373
  %v1403 = vsel %vm1395, %v1401, %v1379
  %v1404 = vsel %vm1395, %v1402, %v1381
  %v1405 = vsel %vm1398, %v1403, %v1387
  %v1406 = vsel %vm1398, %v1404, %v1389
  %v1407 = vld [vmem:[%s4] sm:$0xff]
  %v1408 = vld [vmem:[%s4 + $0x8] sm:$0xff]
  %v1409 = vld [vmem:[%s4 + $0x10] sm:$0xff]
  %v1410 = vld [vmem:[%s4 + $0x18] sm:$0xff]
  %v1411 = vld [vmem:[%s4 + $0x20] sm:$0xff]
  %v1412 = vld [vmem:[%s4 + $0x28] sm:$0xff]
  %v1413 = vld [vmem:[%s4 + $0x30] sm:$0xff]
  %v1414 = vld [vmem:[%s4 + $0x38] sm:$0xff]
  %v1415 = vld [vmem:[%s4 + $0x40] sm:$0xff]
  %v1416 = vld [vmem:[%s4 + $0x48] sm:$0xff]
  %v1417 = vld [vmem:[%s4 + $0x50] sm:$0xff]
  %v1418 = vld [vmem:[%s4 + $0x58] sm:$0xff]
  %v1419 = vld [vmem:[%s4 + $0x60] sm:$0xff]
  %v1420 = vld [vmem:[%s4 + $0x68] sm:$0xff]
  %v1421 = vld [vmem:[%s4 + $0x70] sm:$0xff]
  %v1422 = vld [vmem:[%s4 + $0x78] sm:$0xff]
  %v1423 = vld [vmem:[%s4 + $0x80] sm:$0xff]
  %v1424 = vld [vmem:[%s4 + $0x88] sm:$0xff]
  %v1425 = vld [vmem:[%s4 + $0x90] sm:$0xff]
  %v1426 = vld [vmem:[%s4 + $0x98] sm:$0xff]
  %v1427 = vld [vmem:[%s4 + $0xa0] sm:$0xff]
  %v1428 = vld [vmem:[%s4 + $0xa8] sm:$0xff]
  %v1429 = vld [vmem:[%s4 + $0xb0] sm:$0xff]
  %v1430 = vld [vmem:[%s4 + $0xb8] sm:$0xff]
  %v1431 = vld [vmem:[%s4 + $0xc0] sm:$0xff]
  %v1432 = vld [vmem:[%s4 + $0xc8] sm:$0xff]
  %v1433 = vld [vmem:[%s4 + $0xd0] sm:$0xff]
  %v1434 = vld [vmem:[%s4 + $0xd8] sm:$0xff]
  %v1435 = vld [vmem:[%s4 + $0xe0] sm:$0xff]
  %v1436 = vld [vmem:[%s4 + $0xe8] sm:$0xff]
  %v1437 = vld [vmem:[%s4 + $0xf0] sm:$0xff]
  %v1438 = vld [vmem:[%s4 + $0xf8] sm:$0xff]
  %v1439 = vld [vmem:[%s5] sm:$0x1]
  %v1441 = vperm.slane %v1439, 0
  %1443 = vmatpush.msra.mxu0 %v1422
  %1444 = vmatpush.msra.mxu0 %v1421
  %1445 = vmatpush.msra.mxu0 %v1420
  %1446 = vmatpush.msra.mxu0 %v1419
  %1447 = vmatpush.msra.mxu0 %v1418
  %1448 = vmatpush.msra.mxu0 %v1417
  %1449 = vmatpush.msra.mxu0 %v1416
  %1450 = vmatpush.msra.mxu0 %v1415
  %1451 = vmatpush.msra.mxu0 %v1414
  %1452 = vmatpush.msra.mxu0 %v1413
  %1453 = vmatpush.msra.mxu0 %v1412
  %1454 = vmatpush.msra.mxu0 %v1411
  %1455 = vmatpush.msra.mxu0 %v1410
  %1456 = vmatpush.msra.mxu0 %v1409
  %1457 = vmatpush.msra.mxu0 %v1408
  %1458 = vmatpush.msra.mxu0 %v1407
  %1459 = vmatmul.f32.gmra.mxu0 %v1399
  %v1460 = vpop.f32.mrf.mxu0
  %v1461 = vadd.f32 %v1441, %v1460
  %1462 = vmatmul.f32.gmra.mxu0 %v1400
  %v1463 = vpop.f32.mrf.mxu0
  %v1464 = vadd.f32 %v1441, %v1463
  %1465 = vdwg.mxu0
  %1466 = vmatpush.msra.mxu0 %v1438
  %1467 = vmatpush.msra.mxu0 %v1437
  %1468 = vmatpush.msra.mxu0 %v1436
  %1469 = vmatpush.msra.mxu0 %v1435
  %1470 = vmatpush.msra.mxu0 %v1434
  %1471 = vmatpush.msra.mxu0 %v1433
  %1472 = vmatpush.msra.mxu0 %v1432
  %1473 = vmatpush.msra.mxu0 %v1431
  %1474 = vmatpush.msra.mxu0 %v1430
  %1475 = vmatpush.msra.mxu0 %v1429
  %1476 = vmatpush.msra.mxu0 %v1428
  %1477 = vmatpush.msra.mxu0 %v1427
  %1478 = vmatpush.msra.mxu0 %v1426
  %1479 = vmatpush.msra.mxu0 %v1425
  %1480 = vmatpush.msra.mxu0 %v1424
  %1481 = vmatpush.msra.mxu0 %v1423
  %1482 = vmatmul.f32.gmra.mxu0 %v1405
  %v1483 = vpop.f32.mrf.mxu0
  %v1484 = vadd.f32 %v1461, %v1483
  %1485 = vmatmul.f32.gmra.mxu0 %v1406
  %v1486 = vpop.f32.mrf.mxu0
  %v1487 = vadd.f32 %v1464, %v1486
  %1488 = vdwg.mxu0
  %vm1489 = vcmask 64512
  %1490 = vst.msk [vmem:[%s6] sm:$0xff] %vm1489, %v1484
  %1491 = vst.msk [vmem:[%s6 + $0x8] sm:$0xff] %vm1489, %v1487
  // Predicated region
  $region26: #{tpu_custom_call.1} parent=0 // pred_check
    _
  $region27: #{tpu_custom_call.1} parent=0 // pred_check_branch
    %1493 = sbr.rel (0) target = $region29
  $region28: #{tpu_custom_call.1} parent=0 // pred_region
    _
  $region29: #{tpu_custom_call.1} parent=0 // pred_fallthru
    _
  // Predicated region
  $region30: #{tpu_custom_call.1} parent=0 // pred_check
    _
  $region31: #{tpu_custom_call.1} parent=0 // pred_check_branch
    %1495 = sbr.rel (0) target = $region33
  $region32: #{tpu_custom_call.1} parent=0 // pred_region
    _
  $region33: #{tpu_custom_call.1} parent=0 // pred_fallthru
    _

</llo_original>
